<compile_context>
chip_gen: v5e
topology: v5e:2x2
jax: 0.10.0
libtpu: 0.0.40
codegen_flags: <defaults>
</compile_context>

<pallas_src>
import jax
import jax.numpy as jnp
from jax.experimental import pallas as pl
from jax.experimental.pallas import tpu as pltpu

# ----------------------------- dims & constants ------------------------------

D_IN_RAW, D_IN = 310, 384      # model input width   (padded to lane multiple)
H1 = 128                       # first hidden width  (already lane aligned)
H2_RAW, H2 = 100, 128          # second hidden width (padded)
F_RAW, F = 310, 384            # feature width       (padded)
C_RAW, C_PAD = 3, 128          # class logits        (padded)
DM_RAW, DM_PAD = 5, 128        # domain logits       (padded)
BN_EPS = 1e-5

# Packed-weight column offsets.
#   W_A (384, 384): [ fw1 0:128 | cw1 128:256 | dw1 256:384 ]
#   W_B (128, 896): [ fw2 0:128 | fw3 128:512 | cw2 512:640 | cw3 640:768 | dw2 768:896 ]
#   BIAS (8, 384) rows: 0=fb1 1=fb2 2=fb3 3=[cb1|db1] 4=cb2 5=cb3 6=db2 7=unused


# ------------------------------ shared helpers -------------------------------

def _masked_log_softmax(z, n_valid, pad_value=None):
    """LogSoftmax over the first n_valid lanes of the last axis."""
    cols = jax.lax.broadcasted_iota(jnp.int32, z.shape, 1)
    valid = cols < n_valid
    zm = jnp.where(valid, z, -jnp.inf)
    m = jnp.max(zm, axis=-1, keepdims=True)
    s = jnp.sum(jnp.exp(zm - m), axis=-1, keepdims=True)
    out = zm - m - jnp.log(s)
    if pad_value is not None:
        out = jnp.where(valid, out, pad_value)
    return out


def _mm(act, w):
    """bf16 MXU matmul with f32 accumulation."""
    return jnp.dot(act.astype(jnp.bfloat16), w, preferred_element_type=jnp.float32)


# --------------------------------- the kernel --------------------------------

def cnn_model_kernel(x_ref, wa_ref, wb_ref, b_ref, class_ref, domain_ref):
    x = x_ref[...]                                                      # (TB, 384) f32

    # ---- feature extractor (BN folded into the linears; Dropout = identity) ----
    h = jnp.maximum(_mm(x, wa_ref[:, 0:128]) + b_ref[0:1, 0:128], 0.0)   # L1+BN1+ReLU
    h = jnp.maximum(_mm(h, wb_ref[:, 0:128]) + b_ref[1:2, 0:128], 0.0)   # L2+BN2+ReLU
    z = _mm(h, wb_ref[:, 128:512]) + b_ref[2:3, 0:384]                   # L3 logits
    feature = _masked_log_softmax(z, F_RAW, pad_value=0.0)               # (TB, 384)

    # ReverseLayerF: identity in forward (gradient reversal is backward-only).
    # Fused class+domain first layers: one (384, 256) matmul over `feature`.
    h = jnp.maximum(_mm(feature, wa_ref[:, 128:384]) + b_ref[3:4, 0:256], 0.0)
    hc = h[:, 0:128]                                                     # class branch
    hd = h[:, 128:256]                                                   # domain branch

    # ---- class classifier tail ----
    hc = jnp.maximum(_mm(hc, wb_ref[:, 512:640]) + b_ref[4:5, 0:128], 0.0)
    zc = _mm(hc, wb_ref[:, 640:768]) + b_ref[5:6, 0:128]
    class_ref[...] = _masked_log_softmax(zc, C_RAW)                      # (TB, 128)

    # ---- domain classifier tail ----
    zd = _mm(hd, wb_ref[:, 768:896]) + b_ref[6:7, 0:128]
    domain_ref[...] = _masked_log_softmax(zd, DM_RAW)                    # (TB, 128)


# ----------------------------- host-side parameters --------------------------

def init_raw_params(key):
    """PyTorch-default init: Linear uniform(+-1/sqrt(fan_in)) (stored (in,out)),
    BatchNorm gamma=1, beta=0, running_mean=0, running_var=1."""
    keys = iter(jax.random.split(key, 16))

    def lin(din, dout):
        bound = float(din) ** -0.5
        w = jax.random.uniform(next(keys), (din, dout), jnp.float32, -bound, bound)
        b = jax.random.uniform(next(keys), (dout,), jnp.float32, -bound, bound)
        return w, b

    def bn(n):
        return dict(gamma=jnp.ones((n,), jnp.float32),
                    beta=jnp.zeros((n,), jnp.float32),
                    mean=jnp.zeros((n,), jnp.float32),
                    var=jnp.ones((n,), jnp.float32))

    p = {}
    p["f_w1"], p["f_b1"] = lin(310, 128); p["f_bn1"] = bn(128)
    p["f_w2"], p["f_b2"] = lin(128, 100); p["f_bn2"] = bn(100)
    p["f_w3"], p["f_b3"] = lin(100, 310)
    p["c_w1"], p["c_b1"] = lin(310, 128); p["c_bn1"] = bn(128)
    p["c_w2"], p["c_b2"] = lin(128, 100); p["c_bn2"] = bn(100)
    p["c_w3"], p["c_b3"] = lin(100, 3)
    p["d_w1"], p["d_b1"] = lin(310, 128); p["d_bn1"] = bn(128)
    p["d_w2"], p["d_b2"] = lin(128, 5)
    return p


def pack_params(p, weight_dtype=jnp.bfloat16):
    """Fold eval-mode BN into the linears, pad to lane-aligned shapes, fuse the
    class/domain first layers, and pack into (W_A, W_B, BIAS)."""

    def fold(w, b, bn):
        scale = bn["gamma"] / jnp.sqrt(bn["var"] + BN_EPS)
        return w * scale[None, :], (b - bn["mean"]) * scale + bn["beta"]

    def pad_w(w, rows, cols):
        return jnp.pad(w, ((0, rows - w.shape[0]), (0, cols - w.shape[1])))

    def pad_b(b, cols):
        return jnp.pad(b, (0, cols - b.shape[0]))

    fw1, fb1 = fold(p["f_w1"], p["f_b1"], p["f_bn1"])
    fw2, fb2 = fold(p["f_w2"], p["f_b2"], p["f_bn2"])
    fw3, fb3 = p["f_w3"], p["f_b3"]
    cw1, cb1 = fold(p["c_w1"], p["c_b1"], p["c_bn1"])
    cw2, cb2 = fold(p["c_w2"], p["c_b2"], p["c_bn2"])
    cw3, cb3 = p["c_w3"], p["c_b3"]
    dw1, db1 = fold(p["d_w1"], p["d_b1"], p["d_bn1"])
    dw2, db2 = p["d_w2"], p["d_b2"]

    # W_A: every layer whose input is the (padded) 310-wide vector.
    wa = jnp.concatenate([pad_w(fw1, D_IN, H1),
                          pad_w(cw1, D_IN, H1),
                          pad_w(dw1, D_IN, H1)], axis=1)                 # (384, 384)
    # W_B: every layer whose input is a 128-wide hidden vector.
    wb = jnp.concatenate([pad_w(fw2, H1, H2),
                          pad_w(fw3, H2, F),
                          pad_w(cw2, H1, H2),
                          pad_w(cw3, H2, C_PAD),
                          pad_w(dw2, H1, DM_PAD)], axis=1)               # (128, 896)
    bias = jnp.stack([pad_b(fb1, 384), pad_b(fb2, 384), pad_b(fb3, 384),
                      pad_b(jnp.concatenate([cb1, db1]), 384),
                      pad_b(cb2, 384), pad_b(cb3, 384), pad_b(db2, 384),
                      jnp.zeros((384,), jnp.float32)], axis=0)           # (8, 384)

    return wa.astype(weight_dtype), wb.astype(weight_dtype), bias.astype(jnp.float32)


# --------------------------------- wrapper ------------------------------------

def _round_up(n, m):
    return ((n + m - 1) // m) * m


def cnn_model_forward(input_data, alpha, packed):
    del alpha  # ReverseLayerF is identity in forward; alpha only affects backward.
    wa, wb, bias = packed
    B = input_data.shape[0]

    TB = min(256, _round_up(B, 8))          # batch tile (sublane-aligned)
    B_pad = _round_up(B, TB)
    x = jnp.pad(input_data.astype(jnp.float32),
                ((0, B_pad - B), (0, D_IN - D_IN_RAW)))

    class_pad, domain_pad = pl.pallas_call(
        cnn_model_kernel,
        grid=(B_pad // TB,),
        in_specs=[
            pl.BlockSpec((TB, D_IN), lambda i: (i, 0)),       # x: tiled over batch
            pl.BlockSpec((D_IN, 384), lambda i: (0, 0)),      # W_A: VMEM-resident
            pl.BlockSpec((H1, 896), lambda i: (0, 0)),        # W_B: VMEM-resident
            pl.BlockSpec((8, 384), lambda i: (0, 0)),         # BIAS: VMEM-resident
        ],
        out_specs=(
            pl.BlockSpec((TB, C_PAD), lambda i: (i, 0)),
            pl.BlockSpec((TB, DM_PAD), lambda i: (i, 0)),
        ),
        out_shape=(
            jax.ShapeDtypeStruct((B_pad, C_PAD), jnp.float32),
            jax.ShapeDtypeStruct((B_pad, DM_PAD), jnp.float32),
        ),
        compiler_params=pltpu.CompilerParams(dimension_semantics=("parallel",)),
    )(x, wa, wb, bias)

    return class_pad[:B, :C_RAW], domain_pad[:B, :DM_RAW]


def reference_forward(input_data, packed):
    """Pure-JAX mirror of the kernel math (same packed params) for validation."""
    wa, wb, bias = packed
    xp = jnp.pad(input_data.astype(jnp.float32), ((0, 0), (0, D_IN - D_IN_RAW)))
    h = jnp.maximum(_mm(xp, wa[:, 0:128]) + bias[0:1, 0:128], 0.0)
    h = jnp.maximum(_mm(h, wb[:, 0:128]) + bias[1:2, 0:128], 0.0)
    z = _mm(h, wb[:, 128:512]) + bias[2:3, 0:384]
    feat = _masked_log_softmax(z, F_RAW, pad_value=0.0)
    h = jnp.maximum(_mm(feat, wa[:, 128:384]) + bias[3:4, 0:256], 0.0)
    hc, hd = h[:, 0:128], h[:, 128:256]
    hc = jnp.maximum(_mm(hc, wb[:, 512:640]) + bias[4:5, 0:128], 0.0)
    zc = _mm(hc, wb[:, 640:768]) + bias[5:6, 0:128]
    zd = _mm(hd, wb[:, 768:896]) + bias[6:7, 0:128]
    return (_masked_log_softmax(zc, C_RAW)[:, :C_RAW],
            _masked_log_softmax(zd, DM_RAW)[:, :DM_RAW])


# ----------------------------------- main --------------------------------------

if __name__ == "__main__":
    key = jax.random.PRNGKey(0)
    k_x, k_p = jax.random.split(key)

    B = 8
    x = jax.random.normal(k_x, (B, D_IN_RAW), jnp.float32)
    alpha = 0.5

    raw = init_raw_params(k_p)
    packed = pack_params(raw)

    class_out, domain_out = cnn_model_forward(x, alpha, packed)
    jax.block_until_ready((class_out, domain_out))

    assert class_out.shape == (B, C_RAW)
    assert domain_out.shape == (B, DM_RAW)
    assert bool(jnp.all(jnp.isfinite(class_out)))
    assert bool(jnp.all(jnp.isfinite(domain_out)))
    # log-softmax rows should exp-sum to 1
    assert jnp.allclose(jnp.sum(jnp.exp(class_out), axis=1), 1.0, atol=1e-4)
    assert jnp.allclose(jnp.sum(jnp.exp(domain_out), axis=1), 1.0, atol=1e-4)
    # match the pure-JAX mirror of the same packed math
    ref_c, ref_d = reference_forward(x, packed)
    assert jnp.allclose(class_out, ref_c, atol=1e-2, rtol=1e-2)
    assert jnp.allclose(domain_out, ref_d, atol=1e-2, rtol=1e-2)

    print("KERNEL_OK")
</pallas_src>

<mosaic_0001>
module attributes {stable_mosaic.version = 11 : i64} {
  func.func @cnn_model_kernel(%arg0: i32, %arg1: memref<8x384xf32, #tpu.memory_space<vmem>>, %arg2: memref<384x384xbf16, #tpu.memory_space<vmem>>, %arg3: memref<128x896xbf16, #tpu.memory_space<vmem>>, %arg4: memref<8x384xf32, #tpu.memory_space<vmem>>, %arg5: memref<8x128xf32, #tpu.memory_space<vmem>>, %arg6: memref<8x128xf32, #tpu.memory_space<vmem>>) attributes {dimension_semantics = [#tpu.dimension_semantics<parallel>], iteration_bounds = array<i64: 1>, scalar_prefetch = 0 : i64, scratch_operands = 0 : i64, tpu.core_type = #tpu.core_type<tc>, window_params = [{transform_indices = @transform_0, window_bounds = array<i64: 8, 384>}, {pipeline_mode = #tpu.pipeline_mode<synchronous>, transform_indices = @transform_1, window_bounds = array<i64: 384, 384>}, {pipeline_mode = #tpu.pipeline_mode<synchronous>, transform_indices = @transform_2, window_bounds = array<i64: 128, 896>}, {pipeline_mode = #tpu.pipeline_mode<synchronous>, transform_indices = @transform_3, window_bounds = array<i64: 8, 384>}, {transform_indices = @transform_4, window_bounds = array<i64: 8, 128>}, {transform_indices = @transform_5, window_bounds = array<i64: 8, 128>}]} {
    %c0 = arith.constant 0 : index
    %c0_0 = arith.constant 0 : index
    %0 = vector.load %arg1[%c0, %c0_0] : memref<8x384xf32, #tpu.memory_space<vmem>>, vector<8x384xf32>
    %c0_1 = arith.constant 0 : index
    %c0_2 = arith.constant 0 : index
    %1 = vector.load %arg2[%c0_1, %c0_2] : memref<384x384xbf16, #tpu.memory_space<vmem>>, vector<384x128xbf16>
    %2 = arith.truncf %0 : vector<8x384xf32> to vector<8x384xbf16>
    %cst = arith.constant dense<0.000000e+00> : vector<8x128xf32>
    %3 = tpu.matmul %2, %1, %cst {dimension_numbers = #tpu.dot_dimension_numbers<[1], [0], [0], [1], [0, 0, 1, 1], [], []>} : vector<8x384xbf16>, vector<384x128xbf16>, vector<8x128xf32> -> vector<8x128xf32>
    %c0_3 = arith.constant 0 : index
    %c0_4 = arith.constant 0 : index
    %4 = vector.load %arg4[%c0_3, %c0_4] : memref<8x384xf32, #tpu.memory_space<vmem>>, vector<1x128xf32>
    %5 = vector.broadcast %4 : vector<1x128xf32> to vector<8x128xf32>
    %6 = arith.addf %3, %5 : vector<8x128xf32>
    %cst_5 = arith.constant 0.000000e+00 : f32
    %7 = vector.broadcast %cst_5 : f32 to vector<8x128xf32>
    %8 = arith.maximumf %6, %7 : vector<8x128xf32>
    %c0_6 = arith.constant 0 : index
    %c0_7 = arith.constant 0 : index
    %9 = vector.load %arg3[%c0_6, %c0_7] : memref<128x896xbf16, #tpu.memory_space<vmem>>, vector<128x128xbf16>
    %10 = arith.truncf %8 : vector<8x128xf32> to vector<8x128xbf16>
    %cst_8 = arith.constant dense<0.000000e+00> : vector<8x128xf32>
    %11 = tpu.matmul %10, %9, %cst_8 {dimension_numbers = #tpu.dot_dimension_numbers<[1], [0], [0], [1], [0, 0, 1, 1], [], []>} : vector<8x128xbf16>, vector<128x128xbf16>, vector<8x128xf32> -> vector<8x128xf32>
    %c1 = arith.constant 1 : index
    %c0_9 = arith.constant 0 : index
    %12 = vector.load %arg4[%c1, %c0_9] : memref<8x384xf32, #tpu.memory_space<vmem>>, vector<1x128xf32>
    %13 = vector.broadcast %12 : vector<1x128xf32> to vector<8x128xf32>
    %14 = arith.addf %11, %13 : vector<8x128xf32>
    %cst_10 = arith.constant 0.000000e+00 : f32
    %15 = vector.broadcast %cst_10 : f32 to vector<8x128xf32>
    %16 = arith.maximumf %14, %15 : vector<8x128xf32>
    %c0_11 = arith.constant 0 : index
    %c128 = arith.constant 128 : index
    %17 = vector.load %arg3[%c0_11, %c128] : memref<128x896xbf16, #tpu.memory_space<vmem>>, vector<128x384xbf16>
    %18 = arith.truncf %16 : vector<8x128xf32> to vector<8x128xbf16>
    %cst_12 = arith.constant dense<0.000000e+00> : vector<8x384xf32>
    %19 = tpu.matmul %18, %17, %cst_12 {dimension_numbers = #tpu.dot_dimension_numbers<[1], [0], [0], [1], [0, 0, 1, 1], [], []>} : vector<8x128xbf16>, vector<128x384xbf16>, vector<8x384xf32> -> vector<8x384xf32>
    %c2 = arith.constant 2 : index
    %c0_13 = arith.constant 0 : index
    %20 = vector.load %arg4[%c2, %c0_13] : memref<8x384xf32, #tpu.memory_space<vmem>>, vector<1x384xf32>
    %21 = vector.broadcast %20 : vector<1x384xf32> to vector<8x384xf32>
    %22 = arith.addf %19, %21 : vector<8x384xf32>
    %23 = tpu.iota {dimensions = array<i32: 1>} : vector<8x384xi32>
    %c310_i32 = arith.constant 310 : i32
    %24 = vector.broadcast %c310_i32 : i32 to vector<8x384xi32>
    %25 = arith.cmpi slt, %23, %24 : vector<8x384xi32>
    %cst_14 = arith.constant 0xFF800000 : f32
    %26 = vector.broadcast %cst_14 : f32 to vector<8x384xf32>
    %27 = arith.select %25, %22, %26 : vector<8x384xi1>, vector<8x384xf32>
    %cst_15 = arith.constant dense<0xFF800000> : vector<8xf32>
    %28 = vector.multi_reduction <maximumf>, %27, %cst_15 [1] : vector<8x384xf32> to vector<8xf32>
    %29 = vector.shape_cast %28 : vector<8xf32> to vector<8x1xf32>
    %30 = vector.broadcast %29 : vector<8x1xf32> to vector<8x384xf32>
    %31 = arith.subf %27, %30 : vector<8x384xf32>
    %32 = math.exp %31 : vector<8x384xf32>
    %cst_16 = arith.constant dense<0.000000e+00> : vector<8xf32>
    %33 = vector.multi_reduction <add>, %32, %cst_16 [1] : vector<8x384xf32> to vector<8xf32>
    %34 = vector.shape_cast %33 : vector<8xf32> to vector<8x1xf32>
    %35 = vector.broadcast %29 : vector<8x1xf32> to vector<8x384xf32>
    %36 = arith.subf %27, %35 : vector<8x384xf32>
    %37 = math.log %34 : vector<8x1xf32>
    %38 = vector.broadcast %37 : vector<8x1xf32> to vector<8x384xf32>
    %39 = arith.subf %36, %38 : vector<8x384xf32>
    %cst_17 = arith.constant 0.000000e+00 : f32
    %40 = vector.broadcast %cst_17 : f32 to vector<8x384xf32>
    %41 = arith.select %25, %39, %40 : vector<8x384xi1>, vector<8x384xf32>
    %c0_18 = arith.constant 0 : index
    %c128_19 = arith.constant 128 : index
    %42 = vector.load %arg2[%c0_18, %c128_19] : memref<384x384xbf16, #tpu.memory_space<vmem>>, vector<384x256xbf16>
    %43 = arith.truncf %41 : vector<8x384xf32> to vector<8x384xbf16>
    %cst_20 = arith.constant dense<0.000000e+00> : vector<8x256xf32>
    %44 = tpu.matmul %43, %42, %cst_20 {dimension_numbers = #tpu.dot_dimension_numbers<[1], [0], [0], [1], [0, 0, 1, 1], [], []>} : vector<8x384xbf16>, vector<384x256xbf16>, vector<8x256xf32> -> vector<8x256xf32>
    %c3 = arith.constant 3 : index
    %c0_21 = arith.constant 0 : index
    %45 = vector.load %arg4[%c3, %c0_21] : memref<8x384xf32, #tpu.memory_space<vmem>>, vector<1x256xf32>
    %46 = vector.broadcast %45 : vector<1x256xf32> to vector<8x256xf32>
    %47 = arith.addf %44, %46 : vector<8x256xf32>
    %cst_22 = arith.constant 0.000000e+00 : f32
    %48 = vector.broadcast %cst_22 : f32 to vector<8x256xf32>
    %49 = arith.maximumf %47, %48 : vector<8x256xf32>
    %50 = vector.extract_strided_slice %49 {offsets = [0, 0], sizes = [8, 128], strides = [1, 1]} : vector<8x256xf32> to vector<8x128xf32>
    %51 = vector.extract_strided_slice %49 {offsets = [0, 128], sizes = [8, 128], strides = [1, 1]} : vector<8x256xf32> to vector<8x128xf32>
    %c0_23 = arith.constant 0 : index
    %c512 = arith.constant 512 : index
    %52 = vector.load %arg3[%c0_23, %c512] : memref<128x896xbf16, #tpu.memory_space<vmem>>, vector<128x128xbf16>
    %53 = arith.truncf %50 : vector<8x128xf32> to vector<8x128xbf16>
    %cst_24 = arith.constant dense<0.000000e+00> : vector<8x128xf32>
    %54 = tpu.matmul %53, %52, %cst_24 {dimension_numbers = #tpu.dot_dimension_numbers<[1], [0], [0], [1], [0, 0, 1, 1], [], []>} : vector<8x128xbf16>, vector<128x128xbf16>, vector<8x128xf32> -> vector<8x128xf32>
    %c4 = arith.constant 4 : index
    %c0_25 = arith.constant 0 : index
    %55 = vector.load %arg4[%c4, %c0_25] : memref<8x384xf32, #tpu.memory_space<vmem>>, vector<1x128xf32>
    %56 = vector.broadcast %55 : vector<1x128xf32> to vector<8x128xf32>
    %57 = arith.addf %54, %56 : vector<8x128xf32>
    %cst_26 = arith.constant 0.000000e+00 : f32
    %58 = vector.broadcast %cst_26 : f32 to vector<8x128xf32>
    %59 = arith.maximumf %57, %58 : vector<8x128xf32>
    %c0_27 = arith.constant 0 : index
    %c640 = arith.constant 640 : index
    %60 = vector.load %arg3[%c0_27, %c640] : memref<128x896xbf16, #tpu.memory_space<vmem>>, vector<128x128xbf16>
    %61 = arith.truncf %59 : vector<8x128xf32> to vector<8x128xbf16>
    %cst_28 = arith.constant dense<0.000000e+00> : vector<8x128xf32>
    %62 = tpu.matmul %61, %60, %cst_28 {dimension_numbers = #tpu.dot_dimension_numbers<[1], [0], [0], [1], [0, 0, 1, 1], [], []>} : vector<8x128xbf16>, vector<128x128xbf16>, vector<8x128xf32> -> vector<8x128xf32>
    %c5 = arith.constant 5 : index
    %c0_29 = arith.constant 0 : index
    %63 = vector.load %arg4[%c5, %c0_29] : memref<8x384xf32, #tpu.memory_space<vmem>>, vector<1x128xf32>
    %64 = vector.broadcast %63 : vector<1x128xf32> to vector<8x128xf32>
    %65 = arith.addf %62, %64 : vector<8x128xf32>
    %66 = tpu.iota {dimensions = array<i32: 1>} : vector<8x128xi32>
    %c3_i32 = arith.constant 3 : i32
    %67 = vector.broadcast %c3_i32 : i32 to vector<8x128xi32>
    %68 = arith.cmpi slt, %66, %67 : vector<8x128xi32>
    %cst_30 = arith.constant 0xFF800000 : f32
    %69 = vector.broadcast %cst_30 : f32 to vector<8x128xf32>
    %70 = arith.select %68, %65, %69 : vector<8x128xi1>, vector<8x128xf32>
    %cst_31 = arith.constant dense<0xFF800000> : vector<8xf32>
    %71 = vector.multi_reduction <maximumf>, %70, %cst_31 [1] : vector<8x128xf32> to vector<8xf32>
    %72 = vector.shape_cast %71 : vector<8xf32> to vector<8x1xf32>
    %73 = vector.broadcast %72 : vector<8x1xf32> to vector<8x128xf32>
    %74 = arith.subf %70, %73 : vector<8x128xf32>
    %75 = math.exp %74 : vector<8x128xf32>
    %cst_32 = arith.constant dense<0.000000e+00> : vector<8xf32>
    %76 = vector.multi_reduction <add>, %75, %cst_32 [1] : vector<8x128xf32> to vector<8xf32>
    %77 = vector.shape_cast %76 : vector<8xf32> to vector<8x1xf32>
    %78 = vector.broadcast %72 : vector<8x1xf32> to vector<8x128xf32>
    %79 = arith.subf %70, %78 : vector<8x128xf32>
    %80 = math.log %77 : vector<8x1xf32>
    %81 = vector.broadcast %80 : vector<8x1xf32> to vector<8x128xf32>
    %82 = arith.subf %79, %81 : vector<8x128xf32>
    %c0_33 = arith.constant 0 : index
    %c0_34 = arith.constant 0 : index
    %83 = vector.load %arg5[%c0_33, %c0_34] : memref<8x128xf32, #tpu.memory_space<vmem>>, vector<8x128xf32>
    tpu.vector_store %arg5[%c0_33, %c0_34], %82 {strides = array<i32>} : memref<8x128xf32, #tpu.memory_space<vmem>>, vector<8x128xf32>,
    %c0_35 = arith.constant 0 : index
    %c768 = arith.constant 768 : index
    %84 = vector.load %arg3[%c0_35, %c768] : memref<128x896xbf16, #tpu.memory_space<vmem>>, vector<128x128xbf16>
    %85 = arith.truncf %51 : vector<8x128xf32> to vector<8x128xbf16>
    %cst_36 = arith.constant dense<0.000000e+00> : vector<8x128xf32>
    %86 = tpu.matmul %85, %84, %cst_36 {dimension_numbers = #tpu.dot_dimension_numbers<[1], [0], [0], [1], [0, 0, 1, 1], [], []>} : vector<8x128xbf16>, vector<128x128xbf16>, vector<8x128xf32> -> vector<8x128xf32>
    %c6 = arith.constant 6 : index
    %c0_37 = arith.constant 0 : index
    %87 = vector.load %arg4[%c6, %c0_37] : memref<8x384xf32, #tpu.memory_space<vmem>>, vector<1x128xf32>
    %88 = vector.broadcast %87 : vector<1x128xf32> to vector<8x128xf32>
    %89 = arith.addf %86, %88 : vector<8x128xf32>
    %90 = tpu.iota {dimensions = array<i32: 1>} : vector<8x128xi32>
    %c5_i32 = arith.constant 5 : i32
    %91 = vector.broadcast %c5_i32 : i32 to vector<8x128xi32>
    %92 = arith.cmpi slt, %90, %91 : vector<8x128xi32>
    %cst_38 = arith.constant 0xFF800000 : f32
    %93 = vector.broadcast %cst_38 : f32 to vector<8x128xf32>
    %94 = arith.select %92, %89, %93 : vector<8x128xi1>, vector<8x128xf32>
    %cst_39 = arith.constant dense<0xFF800000> : vector<8xf32>
    %95 = vector.multi_reduction <maximumf>, %94, %cst_39 [1] : vector<8x128xf32> to vector<8xf32>
    %96 = vector.shape_cast %95 : vector<8xf32> to vector<8x1xf32>
    %97 = vector.broadcast %96 : vector<8x1xf32> to vector<8x128xf32>
    %98 = arith.subf %94, %97 : vector<8x128xf32>
    %99 = math.exp %98 : vector<8x128xf32>
    %cst_40 = arith.constant dense<0.000000e+00> : vector<8xf32>
    %100 = vector.multi_reduction <add>, %99, %cst_40 [1] : vector<8x128xf32> to vector<8xf32>
    %101 = vector.shape_cast %100 : vector<8xf32> to vector<8x1xf32>
    %102 = vector.broadcast %96 : vector<8x1xf32> to vector<8x128xf32>
    %103 = arith.subf %94, %102 : vector<8x128xf32>
    %104 = math.log %101 : vector<8x1xf32>
    %105 = vector.broadcast %104 : vector<8x1xf32> to vector<8x128xf32>
    %106 = arith.subf %103, %105 : vector<8x128xf32>
    %c0_41 = arith.constant 0 : index
    %c0_42 = arith.constant 0 : index
    %107 = vector.load %arg6[%c0_41, %c0_42] : memref<8x128xf32, #tpu.memory_space<vmem>>, vector<8x128xf32>
    tpu.vector_store %arg6[%c0_41, %c0_42], %106 {strides = array<i32>} : memref<8x128xf32, #tpu.memory_space<vmem>>, vector<8x128xf32>,
    return
  }
  func.func @transform_0(%arg0: i32) -> (i32, i32) {
    %c0_i32 = arith.constant 0 : i32
    %c0_i32_0 = arith.constant 0 : i32
    return %arg0, %c0_i32 : i32, i32
  }
  func.func @transform_1(%arg0: i32) -> (i32, i32) {
    %c0_i32 = arith.constant 0 : i32
    %c0_i32_0 = arith.constant 0 : i32
    %c0_i32_1 = arith.constant 0 : i32
    return %c0_i32, %c0_i32_0 : i32, i32
  }
  func.func @transform_2(%arg0: i32) -> (i32, i32) {
    %c0_i32 = arith.constant 0 : i32
    %c0_i32_0 = arith.constant 0 : i32
    %c0_i32_1 = arith.constant 0 : i32
    return %c0_i32, %c0_i32_0 : i32, i32
  }
  func.func @transform_3(%arg0: i32) -> (i32, i32) {
    %c0_i32 = arith.constant 0 : i32
    %c0_i32_0 = arith.constant 0 : i32
    %c0_i32_1 = arith.constant 0 : i32
    return %c0_i32, %c0_i32_0 : i32, i32
  }
  func.func @transform_4(%arg0: i32) -> (i32, i32) {
    %c0_i32 = arith.constant 0 : i32
    %c0_i32_0 = arith.constant 0 : i32
    return %arg0, %c0_i32 : i32, i32
  }
  func.func @transform_5(%arg0: i32) -> (i32, i32) {
    %c0_i32 = arith.constant 0 : i32
    %c0_i32_0 = arith.constant 0 : i32
    return %arg0, %c0_i32 : i32, i32
  }
}

</mosaic_0001>

<llo_original>
// kernel: tpu_custom_call.1
$region0: #{tpu_custom_call.1}
  #allocation0 [shape = 'u32[]', space=smem, size = 0x4, offset = 0x4, fixed_abs, tag = 'smem constant byte address 0x4 - core index']
  #allocation1 [shape = 'u32[72,128]{1,0:T(1,128)}', space=vmem, size = 0x9000, scoped, tag = 'internal scratch']
  %s0 = inlined_call_operand.hbm [shape: f32[8,384], index: 0, kind: input, shape index: {}]
  %s1 = inlined_call_operand.hbm [shape: bf16[384,384], index: 1, kind: input, shape index: {}]
  %s2 = inlined_call_operand.hbm [shape: bf16[128,896], index: 2, kind: input, shape index: {}]
  %s3 = inlined_call_operand.hbm [shape: f32[8,384], index: 3, kind: input, shape index: {}]
  %s4 = inlined_call_operand.hbm [shape: f32[8,128], index: 4, kind: output, shape index: {0}]
  %s5 = inlined_call_operand.hbm [shape: f32[8,128], index: 5, kind: output, shape index: {1}]
  %6 = xla_tuple %s4, %s5
  %s7 = sld [smem:[#allocation0]]
  $region50: #{tpu_custom_call.1} parent=0
    _
  %s9 = ssub.s32 1, %s7
  %s10 = scalar_select 0, %s9, %s7
  $region1: #{tpu_custom_call.1} parent=0
    #allocation2 [shape = 'u8[12288]{0}', space=vmem, size = 0x3000, scoped, tag = 'input window, operand 0, single buffered']
    #allocation3 [shape = 's32[1]{0}', space=sflag, size = 0x4, scoped, tag = 'scoped memory for tpu_custom_call.1']
    #allocation4 [shape = 's32[1]{0}', space=sflag, size = 0x4, scoped, tag = 'scoped memory for tpu_custom_call.1']
    #allocation5 [shape = 'u8[294912]{0}', space=vmem, size = 0x48000, scoped, tag = 'input window, operand 1, single buffered']
    #allocation6 [shape = 's32[1]{0}', space=sflag, size = 0x4, scoped, tag = 'scoped memory for tpu_custom_call.1']
    #allocation7 [shape = 'u8[229376]{0}', space=vmem, size = 0x38000, scoped, tag = 'input window, operand 2, single buffered']
    #allocation8 [shape = 'u8[12288]{0}', space=vmem, size = 0x3000, scoped, tag = 'input window, operand 3, single buffered']
    #allocation9 [shape = 's32[1]{0}', space=sflag, size = 0x4, scoped, tag = 'scoped memory for tpu_custom_call.1']
    #allocation10 [shape = 'u8[4096]{0}', space=vmem, size = 0x1000, scoped, tag = 'output window, operand 0, single buffered']
    #allocation11 [shape = 'u8[4096]{0}', space=vmem, size = 0x1000, scoped, tag = 'output window, operand 1, single buffered']
    #allocation12 [shape = 's32[1]{0}', space=sflag, size = 0x4, scoped, tag = 'scoped memory for tpu_custom_call.1']
    %11 = vsyncpa [#allocation3], 0
    %12 = vsyncpa [#allocation6], 0
    %13 = vsyncpa [#allocation9], 0
    %14 = vsyncpa [#allocation4], 0
    %15 = vsyncpa [#allocation12], 0
    // Predicated region
    $region2: #{tpu_custom_call.1} parent=1 // pred_check
      _
    $region3: #{tpu_custom_call.1} parent=1 // pred_check_branch
      %17 = sbr.rel (0) target = $region5
    $region4: #{tpu_custom_call.1} parent=1 // pred_region
      %19 = vsyncadd [#allocation3], 0
      %s21 = sshll.u32 %s0, 4
      %s22 = int_to_ptr.hbm [resolvable:$true] %s21
      %s23 = sshll.u32 [#allocation2], 4
      %s24 = int_to_ptr.vmem [resolvable:$true] %s23
      %26 = dma.hbm_to_vmem [thread:$0]  %s22, 384, %s24, [#allocation3]
    $region5: #{tpu_custom_call.1} parent=1 // pred_fallthru
      _
    // Predicated region
    $region6: #{tpu_custom_call.1} parent=1 // pred_check
      _
    $region7: #{tpu_custom_call.1} parent=1 // pred_check_branch
      %28 = sbr.rel (0) target = $region9
    $region8: #{tpu_custom_call.1} parent=1 // pred_region
      %30 = vsyncadd [#allocation6], 0
      %s31 = sshll.u32 %s1, 4
      %s32 = int_to_ptr.hbm [resolvable:$true] %s31
      %s33 = sshll.u32 [#allocation5], 4
      %s34 = int_to_ptr.vmem [resolvable:$true] %s33
      %39 = dma.hbm_to_vmem [thread:$0]  %s32, 9216, %s34, [#allocation6], 192, 192, 12
    $region9: #{tpu_custom_call.1} parent=1 // pred_fallthru
      _
    // Predicated region
    $region10: #{tpu_custom_call.1} parent=1 // pred_check
      _
    $region11: #{tpu_custom_call.1} parent=1 // pred_check_branch
      %41 = sbr.rel (0) target = $region13
    $region12: #{tpu_custom_call.1} parent=1 // pred_region
      %43 = vsyncadd [#allocation6], 0
      %s44 = sshll.u32 %s2, 4
      %s45 = int_to_ptr.hbm [resolvable:$true] %s44
      %s46 = sshll.u32 [#allocation7], 4
      %s47 = int_to_ptr.vmem [resolvable:$true] %s46
      %52 = dma.hbm_to_vmem [thread:$0]  %s45, 7168, %s47, [#allocation6], 448, 448, 28
    $region13: #{tpu_custom_call.1} parent=1 // pred_fallthru
      _
    // Predicated region
    $region14: #{tpu_custom_call.1} parent=1 // pred_check
      _
    $region15: #{tpu_custom_call.1} parent=1 // pred_check_branch
      %54 = sbr.rel (0) target = $region17
    $region16: #{tpu_custom_call.1} parent=1 // pred_region
      %56 = vsyncadd [#allocation9], 0
      %s58 = sshll.u32 %s3, 4
      %s59 = int_to_ptr.hbm [resolvable:$true] %s58
      %s60 = sshll.u32 [#allocation8], 4
      %s61 = int_to_ptr.vmem [resolvable:$true] %s60
      %63 = dma.hbm_to_vmem [thread:$0]  %s59, 384, %s61, [#allocation9]
    $region17: #{tpu_custom_call.1} parent=1 // pred_fallthru
      _
    // Predicated region
    $region18: #{tpu_custom_call.1} parent=1 // pred_check
      _
    $region19: #{tpu_custom_call.1} parent=1 // pred_check_branch
      %65 = sbr.rel (0) target = $region21
    $region20: #{tpu_custom_call.1} parent=1 // pred_region
      %67 = dma.done [#allocation3], 384
    $region21: #{tpu_custom_call.1} parent=1 // pred_fallthru
      _
    // Predicated region
    $region22: #{tpu_custom_call.1} parent=1 // pred_check
      _
    $region23: #{tpu_custom_call.1} parent=1 // pred_check_branch
      %69 = sbr.rel (0) target = $region25
    $region24: #{tpu_custom_call.1} parent=1 // pred_region
      %71 = dma.done [#allocation6], 9216
    $region25: #{tpu_custom_call.1} parent=1 // pred_fallthru
      _
    // Predicated region
    $region26: #{tpu_custom_call.1} parent=1 // pred_check
      _
    $region27: #{tpu_custom_call.1} parent=1 // pred_check_branch
      %73 = sbr.rel (0) target = $region29
    $region28: #{tpu_custom_call.1} parent=1 // pred_region
      %75 = dma.done [#allocation6], 7168
    $region29: #{tpu_custom_call.1} parent=1 // pred_fallthru
      _
    // Predicated region
    $region30: #{tpu_custom_call.1} parent=1 // pred_check
      _
    $region31: #{tpu_custom_call.1} parent=1 // pred_check_branch
      %77 = sbr.rel (0) target = $region33
    $region32: #{tpu_custom_call.1} parent=1 // pred_region
      %79 = dma.done [#allocation9], 384
    $region33: #{tpu_custom_call.1} parent=1 // pred_fallthru
      _
    %v80 = vld [vmem:[#allocation2] sm:$0xff]
    %v81 = vld [vmem:[#allocation2 + $0x8] sm:$0xff]
    %v82 = vld [vmem:[#allocation2 + $0x10] sm:$0xff]
    %v83 = vld [vmem:[#allocation5] sm:$0xf]
    %v84 = vld [vmem:[#allocation5 + $0xc] sm:$0xf]
    %v85 = vld [vmem:[#allocation5 + $0x18] sm:$0xf]
    %v86 = vld [vmem:[#allocation5 + $0x24] sm:$0xf]
    %v87 = vld [vmem:[#allocation5 + $0x30] sm:$0xf]
    %v88 = vld [vmem:[#allocation5 + $0x3c] sm:$0xf]
    %v89 = vld [vmem:[#allocation5 + $0x48] sm:$0xf]
    %v90 = vld [vmem:[#allocation5 + $0x54] sm:$0xf]
    %v91 = vld [vmem:[#allocation5 + $0x60] sm:$0xf]
    %v92 = vld [vmem:[#allocation5 + $0x6c] sm:$0xf]
    %v93 = vld [vmem:[#allocation5 + $0x78] sm:$0xf]
    %v94 = vld [vmem:[#allocation5 + $0x84] sm:$0xf]
    %v95 = vld [vmem:[#allocation5 + $0x90] sm:$0xf]
    %v96 = vld [vmem:[#allocation5 + $0x9c] sm:$0xf]
    %v97 = vld [vmem:[#allocation5 + $0xa8] sm:$0xf]
    %v98 = vld [vmem:[#allocation5 + $0xb4] sm:$0xf]
    %v99 = vld [vmem:[#allocation5 + $0xc0] sm:$0xf]
    %v100 = vld [vmem:[#allocation5 + $0xcc] sm:$0xf]
    %v101 = vld [vmem:[#allocation5 + $0xd8] sm:$0xf]
    %v102 = vld [vmem:[#allocation5 + $0xe4] sm:$0xf]
    %v103 = vld [vmem:[#allocation5 + $0xf0] sm:$0xf]
    %v104 = vld [vmem:[#allocation5 + $0xfc] sm:$0xf]
    %v105 = vld [vmem:[#allocation5 + $0x108] sm:$0xf]
    %v106 = vld [vmem:[#allocation5 + $0x114] sm:$0xf]
    %v107 = vld [vmem:[#allocation5 + $0x120] sm:$0xf]
    %v108 = vld [vmem:[#allocation5 + $0x12c] sm:$0xf]
    %v109 = vld [vmem:[#allocation5 + $0x138] sm:$0xf]
    %v110 = vld [vmem:[#allocation5 + $0x144] sm:$0xf]
    %v111 = vld [vmem:[#allocation5 + $0x150] sm:$0xf]
    %v112 = vld [vmem:[#allocation5 + $0x15c] sm:$0xf]
    %v113 = vld [vmem:[#allocation5 + $0x168] sm:$0xf]
    %v114 = vld [vmem:[#allocation5 + $0x174] sm:$0xf]
    %v115 = vld [vmem:[#allocation5 + $0x180] sm:$0xf]
    %v116 = vld [vmem:[#allocation5 + $0x18c] sm:$0xf]
    %v117 = vld [vmem:[#allocation5 + $0x198] sm:$0xf]
    %v118 = vld [vmem:[#allocation5 + $0x1a4] sm:$0xf]
    %v119 = vld [vmem:[#allocation5 + $0x1b0] sm:$0xf]
    %v120 = vld [vmem:[#allocation5 + $0x1bc] sm:$0xf]
    %v121 = vld [vmem:[#allocation5 + $0x1c8] sm:$0xf]
    %v122 = vld [vmem:[#allocation5 + $0x1d4] sm:$0xf]
    %v123 = vld [vmem:[#allocation5 + $0x1e0] sm:$0xf]
    %v124 = vld [vmem:[#allocation5 + $0x1ec] sm:$0xf]
    %v125 = vld [vmem:[#allocation5 + $0x1f8] sm:$0xf]
    %v126 = vld [vmem:[#allocation5 + $0x204] sm:$0xf]
    %v127 = vld [vmem:[#allocation5 + $0x210] sm:$0xf]
    %v128 = vld [vmem:[#allocation5 + $0x21c] sm:$0xf]
    %v129 = vld [vmem:[#allocation5 + $0x228] sm:$0xf]
    %v130 = vld [vmem:[#allocation5 + $0x234] sm:$0xf]
    %v131 = vpack.c.bf16 %v80, %v80
    %v132 = vpack.c.bf16 %v81, %v81
    %v133 = vpack.c.bf16 %v82, %v82
    %v134 = vld [vmem:[#allocation8] ss:$0 sm:$0xff]
    %v183 = vunpack.c.l.b16 %v83
    %v184 = vunpack.c.l.b16 %v84
    %v185 = vunpack.c.l.b16 %v85
    %v186 = vunpack.c.l.b16 %v86
    %v187 = vunpack.c.l.b16 %v87
    %v188 = vunpack.c.l.b16 %v88
    %v189 = vunpack.c.l.b16 %v89
    %v190 = vunpack.c.l.b16 %v90
    %v191 = vunpack.c.l.b16 %v91
    %v192 = vunpack.c.l.b16 %v92
    %v193 = vunpack.c.l.b16 %v93
    %v194 = vunpack.c.l.b16 %v94
    %v195 = vunpack.c.l.b16 %v95
    %v196 = vunpack.c.l.b16 %v96
    %v197 = vunpack.c.l.b16 %v97
    %v198 = vunpack.c.l.b16 %v98
    %v199 = vunpack.c.l.b16 %v99
    %v200 = vunpack.c.l.b16 %v100
    %v201 = vunpack.c.l.b16 %v101
    %v202 = vunpack.c.l.b16 %v102
    %v203 = vunpack.c.l.b16 %v103
    %v204 = vunpack.c.l.b16 %v104
    %v205 = vunpack.c.l.b16 %v105
    %v206 = vunpack.c.l.b16 %v106
    %v207 = vunpack.c.l.b16 %v107
    %v208 = vunpack.c.l.b16 %v108
    %v209 = vunpack.c.l.b16 %v109
    %v210 = vunpack.c.l.b16 %v110
    %v211 = vunpack.c.l.b16 %v111
    %v212 = vunpack.c.l.b16 %v112
    %v213 = vunpack.c.l.b16 %v113
    %v214 = vunpack.c.l.b16 %v114
    %v215 = vunpack.c.l.b16 %v115
    %v216 = vunpack.c.l.b16 %v116
    %v217 = vunpack.c.l.b16 %v117
    %v218 = vunpack.c.l.b16 %v118
    %v219 = vunpack.c.l.b16 %v119
    %v220 = vunpack.c.l.b16 %v120
    %v221 = vunpack.c.l.b16 %v121
    %v222 = vunpack.c.l.b16 %v122
    %v223 = vunpack.c.l.b16 %v123
    %v224 = vunpack.c.l.b16 %v124
    %v225 = vunpack.c.l.b16 %v125
    %v226 = vunpack.c.l.b16 %v126
    %v227 = vunpack.c.l.b16 %v127
    %v228 = vunpack.c.l.b16 %v128
    %v229 = vunpack.c.l.b16 %v129
    %v230 = vunpack.c.l.b16 %v130
    %v231 = vpack.c.b16 %v184, %v183
    %v232 = vpack.c.b16 %v186, %v185
    %v233 = vpack.c.b16 %v188, %v187
    %v234 = vpack.c.b16 %v190, %v189
    %v235 = vpack.c.b16 %v192, %v191
    %v236 = vpack.c.b16 %v194, %v193
    %v237 = vpack.c.b16 %v196, %v195
    %v238 = vpack.c.b16 %v198, %v197
    %v239 = vpack.c.b16 %v200, %v199
    %v240 = vpack.c.b16 %v202, %v201
    %v241 = vpack.c.b16 %v204, %v203
    %v242 = vpack.c.b16 %v206, %v205
    %v243 = vpack.c.b16 %v208, %v207
    %v244 = vpack.c.b16 %v210, %v209
    %v245 = vpack.c.b16 %v212, %v211
    %v246 = vpack.c.b16 %v214, %v213
    %v247 = vpack.c.b16 %v216, %v215
    %v248 = vpack.c.b16 %v218, %v217
    %v249 = vpack.c.b16 %v220, %v219
    %v250 = vpack.c.b16 %v222, %v221
    %v251 = vpack.c.b16 %v224, %v223
    %v252 = vpack.c.b16 %v226, %v225
    %v253 = vpack.c.b16 %v228, %v227
    %v254 = vpack.c.b16 %v230, %v229
    %279 = vmatpush.bf16.msra.mxu0 %v238
    %280 = vmatpush.bf16.msra.mxu0 %v237
    %281 = vmatpush.bf16.msra.mxu0 %v236
    %282 = vmatpush.bf16.msra.mxu0 %v235
    %283 = vmatpush.bf16.msra.mxu0 %v234
    %284 = vmatpush.bf16.msra.mxu0 %v233
    %285 = vmatpush.bf16.msra.mxu0 %v232
    %286 = vmatpush.bf16.msra.mxu0 %v231
    %287 = vmatmul.bf16.gmra.mxu0 %v131
    %v288 = vpop.f32.mrf.mxu0
    %v289 = vadd.f32 %v134, %v288
    %v290 = vpop.f32.mrf.mxu0
    %291 = vdwg.mxu0
    %292 = vmatpush.bf16.msra.mxu0 %v246
    %293 = vmatpush.bf16.msra.mxu0 %v245
    %294 = vmatpush.bf16.msra.mxu0 %v244
    %295 = vmatpush.bf16.msra.mxu0 %v243
    %296 = vmatpush.bf16.msra.mxu0 %v242
    %297 = vmatpush.bf16.msra.mxu0 %v241
    %298 = vmatpush.bf16.msra.mxu0 %v240
    %299 = vmatpush.bf16.msra.mxu0 %v239
    %300 = vmatmul.bf16.gmra.mxu0 %v132
    %v301 = vpop.f32.mrf.mxu0
    %v302 = vadd.f32 %v289, %v301
    %v303 = vpop.f32.mrf.mxu0
    %304 = vdwg.mxu0
    %305 = vmatpush.bf16.msra.mxu0 %v254
    %306 = vmatpush.bf16.msra.mxu0 %v253
    %307 = vmatpush.bf16.msra.mxu0 %v252
    %308 = vmatpush.bf16.msra.mxu0 %v251
    %309 = vmatpush.bf16.msra.mxu0 %v250
    %310 = vmatpush.bf16.msra.mxu0 %v249
    %311 = vmatpush.bf16.msra.mxu0 %v248
    %312 = vmatpush.bf16.msra.mxu0 %v247
    %313 = vmatmul.bf16.gmra.mxu0 %v133
    %v314 = vpop.f32.mrf.mxu0
    %v315 = vadd.f32 %v302, %v314
    %v316 = vpop.f32.mrf.mxu0
    %317 = vdwg.mxu0
    %v318 = vmax.f32 %v315, 0.0
    %v319 = vld [vmem:[#allocation7] sm:$0xf]
    %v320 = vld [vmem:[#allocation7 + $0x1c] sm:$0xf]
    %v321 = vld [vmem:[#allocation7 + $0x38] sm:$0xf]
    %v322 = vld [vmem:[#allocation7 + $0x54] sm:$0xf]
    %v323 = vld [vmem:[#allocation7 + $0x70] sm:$0xf]
    %v324 = vld [vmem:[#allocation7 + $0x8c] sm:$0xf]
    %v325 = vld [vmem:[#allocation7 + $0xa8] sm:$0xf]
    %v326 = vld [vmem:[#allocation7 + $0xc4] sm:$0xf]
    %v327 = vld [vmem:[#allocation7 + $0xe0] sm:$0xf]
    %v328 = vld [vmem:[#allocation7 + $0xfc] sm:$0xf]
    %v329 = vld [vmem:[#allocation7 + $0x118] sm:$0xf]
    %v330 = vld [vmem:[#allocation7 + $0x134] sm:$0xf]
    %v331 = vld [vmem:[#allocation7 + $0x150] sm:$0xf]
    %v332 = vld [vmem:[#allocation7 + $0x16c] sm:$0xf]
    %v333 = vld [vmem:[#allocation7 + $0x188] sm:$0xf]
    %v334 = vld [vmem:[#allocation7 + $0x1a4] sm:$0xf]
    %v335 = vpack.c.bf16 %v318, %v318
    %v336 = vld [vmem:[#allocation8 + $0x1] ss:$0 sm:$0xff]
    %v353 = vunpack.c.l.b16 %v319
    %v354 = vunpack.c.l.b16 %v320
    %v355 = vunpack.c.l.b16 %v321
    %v356 = vunpack.c.l.b16 %v322
    %v357 = vunpack.c.l.b16 %v323
    %v358 = vunpack.c.l.b16 %v324
    %v359 = vunpack.c.l.b16 %v325
    %v360 = vunpack.c.l.b16 %v326
    %v361 = vunpack.c.l.b16 %v327
    %v362 = vunpack.c.l.b16 %v328
    %v363 = vunpack.c.l.b16 %v329
    %v364 = vunpack.c.l.b16 %v330
    %v365 = vunpack.c.l.b16 %v331
    %v366 = vunpack.c.l.b16 %v332
    %v367 = vunpack.c.l.b16 %v333
    %v368 = vunpack.c.l.b16 %v334
    %v369 = vpack.c.b16 %v354, %v353
    %v370 = vpack.c.b16 %v356, %v355
    %v371 = vpack.c.b16 %v358, %v357
    %v372 = vpack.c.b16 %v360, %v359
    %v373 = vpack.c.b16 %v362, %v361
    %v374 = vpack.c.b16 %v364, %v363
    %v375 = vpack.c.b16 %v366, %v365
    %v376 = vpack.c.b16 %v368, %v367
    %385 = vmatpush.bf16.msra.mxu0 %v376
    %386 = vmatpush.bf16.msra.mxu0 %v375
    %387 = vmatpush.bf16.msra.mxu0 %v374
    %388 = vmatpush.bf16.msra.mxu0 %v373
    %389 = vmatpush.bf16.msra.mxu0 %v372
    %390 = vmatpush.bf16.msra.mxu0 %v371
    %391 = vmatpush.bf16.msra.mxu0 %v370
    %392 = vmatpush.bf16.msra.mxu0 %v369
    %393 = vmatmul.bf16.gmra.mxu0 %v335
    %v394 = vpop.f32.mrf.mxu0
    %v395 = vadd.f32 %v336, %v394
    %v396 = vpop.f32.mrf.mxu0
    %397 = vdwg.mxu0
    %v398 = vmax.f32 %v395, 0.0
    %v399 = vld [vmem:[#allocation7 + $0x4] sm:$0xff]
    %v400 = vld [vmem:[#allocation7 + $0xc] sm:$0xf]
    %v401 = vld [vmem:[#allocation7 + $0x20] sm:$0xff]
    %v402 = vld [vmem:[#allocation7 + $0x28] sm:$0xf]
    %v403 = vld [vmem:[#allocation7 + $0x3c] sm:$0xff]
    %v404 = vld [vmem:[#allocation7 + $0x44] sm:$0xf]
    %v405 = vld [vmem:[#allocation7 + $0x58] sm:$0xff]
    %v406 = vld [vmem:[#allocation7 + $0x60] sm:$0xf]
    %v407 = vld [vmem:[#allocation7 + $0x74] sm:$0xff]
    %v408 = vld [vmem:[#allocation7 + $0x7c] sm:$0xf]
    %v409 = vld [vmem:[#allocation7 + $0x90] sm:$0xff]
    %v410 = vld [vmem:[#allocation7 + $0x98] sm:$0xf]
    %v411 = vld [vmem:[#allocation7 + $0xac] sm:$0xff]
    %v412 = vld [vmem:[#allocation7 + $0xb4] sm:$0xf]
    %v413 = vld [vmem:[#allocation7 + $0xc8] sm:$0xff]
    %v414 = vld [vmem:[#allocation7 + $0xd0] sm:$0xf]
    %v415 = vld [vmem:[#allocation7 + $0xe4] sm:$0xff]
    %v416 = vld [vmem:[#allocation7 + $0xec] sm:$0xf]
    %v417 = vld [vmem:[#allocation7 + $0x100] sm:$0xff]
    %v418 = vld [vmem:[#allocation7 + $0x108] sm:$0xf]
    %v419 = vld [vmem:[#allocation7 + $0x11c] sm:$0xff]
    %v420 = vld [vmem:[#allocation7 + $0x124] sm:$0xf]
    %v421 = vld [vmem:[#allocation7 + $0x138] sm:$0xff]
    %v422 = vld [vmem:[#allocation7 + $0x140] sm:$0xf]
    %v423 = vld [vmem:[#allocation7 + $0x154] sm:$0xff]
    %v424 = vld [vmem:[#allocation7 + $0x15c] sm:$0xf]
    %v425 = vld [vmem:[#allocation7 + $0x170] sm:$0xff]
    %v426 = vld [vmem:[#allocation7 + $0x178] sm:$0xf]
    %v427 = vld [vmem:[#allocation7 + $0x18c] sm:$0xff]
    %v428 = vld [vmem:[#allocation7 + $0x194] sm:$0xf]
    %v429 = vld [vmem:[#allocation7 + $0x1a8] sm:$0xff]
    %v430 = vld [vmem:[#allocation7 + $0x1b0] sm:$0xf]
    %v431 = vpack.c.bf16 %v398, %v398
    %s432 = scalar_lea.vmem [#allocation8], 2
    %v433 = vld [vmem:[%s432] ss:$8 sm:$0x7]
    %v435 = vperm.slane %v433, 0
    %v436 = vperm.slane %v433, 1
    %v437 = vperm.slane %v433, 2
    %v473 = vunpack.c.l.b16 %v399
    %v474 = vunpack.c.h.b16 %v399
    %v475 = vunpack.c.l.b16 %v400
    %v476 = vunpack.c.l.b16 %v401
    %v477 = vunpack.c.h.b16 %v401
    %v478 = vunpack.c.l.b16 %v402
    %v479 = vunpack.c.l.b16 %v403
    %v480 = vunpack.c.h.b16 %v403
    %v481 = vunpack.c.l.b16 %v404
    %v482 = vunpack.c.l.b16 %v405
    %v483 = vunpack.c.h.b16 %v405
    %v484 = vunpack.c.l.b16 %v406
    %v485 = vunpack.c.l.b16 %v407
    %v486 = vunpack.c.h.b16 %v407
    %v487 = vunpack.c.l.b16 %v408
    %v488 = vunpack.c.l.b16 %v409
    %v489 = vunpack.c.h.b16 %v409
    %v490 = vunpack.c.l.b16 %v410
    %v491 = vunpack.c.l.b16 %v411
    %v492 = vunpack.c.h.b16 %v411
    %v493 = vunpack.c.l.b16 %v412
    %v494 = vunpack.c.l.b16 %v413
    %v495 = vunpack.c.h.b16 %v413
    %v496 = vunpack.c.l.b16 %v414
    %v497 = vunpack.c.l.b16 %v415
    %v498 = vunpack.c.h.b16 %v415
    %v499 = vunpack.c.l.b16 %v416
    %v500 = vunpack.c.l.b16 %v417
    %v501 = vunpack.c.h.b16 %v417
    %v502 = vunpack.c.l.b16 %v418
    %v503 = vunpack.c.l.b16 %v419
    %v504 = vunpack.c.h.b16 %v419
    %v505 = vunpack.c.l.b16 %v420
    %v506 = vunpack.c.l.b16 %v421
    %v507 = vunpack.c.h.b16 %v421
    %v508 = vunpack.c.l.b16 %v422
    %v509 = vunpack.c.l.b16 %v423
    %v510 = vunpack.c.h.b16 %v423
    %v511 = vunpack.c.l.b16 %v424
    %v512 = vunpack.c.l.b16 %v425
    %v513 = vunpack.c.h.b16 %v425
    %v514 = vunpack.c.l.b16 %v426
    %v515 = vunpack.c.l.b16 %v427
    %v516 = vunpack.c.h.b16 %v427
    %v517 = vunpack.c.l.b16 %v428
    %v518 = vunpack.c.l.b16 %v429
    %v519 = vunpack.c.h.b16 %v429
    %v520 = vunpack.c.l.b16 %v430
    %v521 = vpack.c.b16 %v476, %v473
    %v522 = vpack.c.b16 %v477, %v474
    %v523 = vpack.c.b16 %v478, %v475
    %v524 = vpack.c.b16 %v482, %v479
    %v525 = vpack.c.b16 %v483, %v480
    %v526 = vpack.c.b16 %v484, %v481
    %v527 = vpack.c.b16 %v488, %v485
    %v528 = vpack.c.b16 %v489, %v486
    %v529 = vpack.c.b16 %v490, %v487
    %v530 = vpack.c.b16 %v494, %v491
    %v531 = vpack.c.b16 %v495, %v492
    %v532 = vpack.c.b16 %v496, %v493
    %v533 = vpack.c.b16 %v500, %v497
    %v534 = vpack.c.b16 %v501, %v498
    %v535 = vpack.c.b16 %v502, %v499
    %v536 = vpack.c.b16 %v506, %v503
    %v537 = vpack.c.b16 %v507, %v504
    %v538 = vpack.c.b16 %v508, %v505
    %v539 = vpack.c.b16 %v512, %v509
    %v540 = vpack.c.b16 %v513, %v510
    %v541 = vpack.c.b16 %v514, %v511
    %v542 = vpack.c.b16 %v518, %v515
    %v543 = vpack.c.b16 %v519, %v516
    %v544 = vpack.c.b16 %v520, %v517
    %569 = vmatpush.bf16.msra.mxu0 %v542
    %570 = vmatpush.bf16.msra.mxu0 %v539
    %571 = vmatpush.bf16.msra.mxu0 %v536
    %572 = vmatpush.bf16.msra.mxu0 %v533
    %573 = vmatpush.bf16.msra.mxu0 %v530
    %574 = vmatpush.bf16.msra.mxu0 %v527
    %575 = vmatpush.bf16.msra.mxu0 %v524
    %576 = vmatpush.bf16.msra.mxu0 %v521
    %577 = vmatmul.bf16.gmra.mxu0 %v431
    %v578 = vpop.f32.mrf.mxu0
    %v579 = vadd.f32 %v435, %v578
    %v580 = vpop.f32.mrf.mxu0
    %581 = vdwg.mxu0
    %582 = vmatpush.bf16.msra.mxu0 %v543
    %583 = vmatpush.bf16.msra.mxu0 %v540
    %584 = vmatpush.bf16.msra.mxu0 %v537
    %585 = vmatpush.bf16.msra.mxu0 %v534
    %586 = vmatpush.bf16.msra.mxu0 %v531
    %587 = vmatpush.bf16.msra.mxu0 %v528
    %588 = vmatpush.bf16.msra.mxu0 %v525
    %589 = vmatpush.bf16.msra.mxu0 %v522
    %590 = vmatmul.bf16.gmra.mxu0 %v431
    %v591 = vpop.f32.mrf.mxu0
    %v592 = vadd.f32 %v436, %v591
    %v593 = vpop.f32.mrf.mxu0
    %594 = vdwg.mxu0
    %595 = vmatpush.bf16.msra.mxu0 %v544
    %596 = vmatpush.bf16.msra.mxu0 %v541
    %597 = vmatpush.bf16.msra.mxu0 %v538
    %598 = vmatpush.bf16.msra.mxu0 %v535
    %599 = vmatpush.bf16.msra.mxu0 %v532
    %600 = vmatpush.bf16.msra.mxu0 %v529
    %601 = vmatpush.bf16.msra.mxu0 %v526
    %602 = vmatpush.bf16.msra.mxu0 %v523
    %603 = vmatmul.bf16.gmra.mxu0 %v431
    %v604 = vpop.f32.mrf.mxu0
    %v605 = vadd.f32 %v437, %v604
    %v606 = vpop.f32.mrf.mxu0
    %607 = vdwg.mxu0
    %v608 = vlaneseq
    %v609 = vand.u32 %v608, 127
    %v610 = vadd.s32 %v609, 128
    %v611 = vadd.s32 %v609, 256
    %vm612 = vcmp.lt.s32.totalorder %v609, 310
    %vm613 = vcmp.lt.s32.totalorder %v610, 310
    %vm614 = vcmp.lt.s32.totalorder %v611, 310
    %v615 = vsel %vm612, %v579, -inf
    %v616 = vsel %vm613, %v592, -inf
    %v617 = vsel %vm614, %v605, -inf
    %v618 = vmax.f32 %v615, %v616
    %v619 = vmax.f32 %v618, %v617
    %620 = vmax.xlane.f32.xlu0 %v619
    %v621 = vpop.xlane.xlu0 %620
    %v622 = vsub.f32 %v615, %v621
    %v623 = vsub.f32 %v616, %v621
    %v624 = vsub.f32 %v617, %v621
    %v625 = vmul.f32 %v622, 1.442695
    %v626 = vpow.pop %v625
    %v627 = vmul.f32 %v623, 1.442695
    %v628 = vpow.pop %v627
    %v629 = vmul.f32 %v624, 1.442695
    %v630 = vpow.pop %v629
    %v631 = vadd.f32 %v626, %v628
    %v632 = vadd.f32 %v631, %v630
    %633 = vadd.xlane.f32.xlu0 %v632
    %v634 = vpop.xlane.xlu0 %633
    %v635 = vlog2.pop %v634
    %v636 = vmul.f32 %v635, 0.6931472
    %v637 = vsub.f32 %v622, %v636
    %v638 = vsub.f32 %v623, %v636
    %v639 = vsub.f32 %v624, %v636
    %v640 = vsel %vm612, %v637, 0.0
    %v641 = vsel %vm613, %v638, 0.0
    %v642 = vsel %vm614, %v639, 0.0
    %v643 = vld [vmem:[#allocation5 + $0x4] sm:$0xff]
    %v644 = vld [vmem:[#allocation5 + $0x10] sm:$0xff]
    %v645 = vld [vmem:[#allocation5 + $0x1c] sm:$0xff]
    %v646 = vld [vmem:[#allocation5 + $0x28] sm:$0xff]
    %v647 = vld [vmem:[#allocation5 + $0x34] sm:$0xff]
    %v648 = vld [vmem:[#allocation5 + $0x40] sm:$0xff]
    %v649 = vld [vmem:[#allocation5 + $0x4c] sm:$0xff]
    %v650 = vld [vmem:[#allocation5 + $0x58] sm:$0xff]
    %v651 = vld [vmem:[#allocation5 + $0x64] sm:$0xff]
    %v652 = vld [vmem:[#allocation5 + $0x70] sm:$0xff]
    %v653 = vld [vmem:[#allocation5 + $0x7c] sm:$0xff]
    %v654 = vld [vmem:[#allocation5 + $0x88] sm:$0xff]
    %v655 = vld [vmem:[#allocation5 + $0x94] sm:$0xff]
    %v656 = vld [vmem:[#allocation5 + $0xa0] sm:$0xff]
    %v657 = vld [vmem:[#allocation5 + $0xac] sm:$0xff]
    %v658 = vld [vmem:[#allocation5 + $0xb8] sm:$0xff]
    %v659 = vld [vmem:[#allocation5 + $0xc4] sm:$0xff]
    %v660 = vld [vmem:[#allocation5 + $0xd0] sm:$0xff]
    %v661 = vld [vmem:[#allocation5 + $0xdc] sm:$0xff]
    %v662 = vld [vmem:[#allocation5 + $0xe8] sm:$0xff]
    %v663 = vld [vmem:[#allocation5 + $0xf4] sm:$0xff]
    %v664 = vld [vmem:[#allocation5 + $0x100] sm:$0xff]
    %v665 = vld [vmem:[#allocation5 + $0x10c] sm:$0xff]
    %v666 = vld [vmem:[#allocation5 + $0x118] sm:$0xff]
    %v667 = vld [vmem:[#allocation5 + $0x124] sm:$0xff]
    %v668 = vld [vmem:[#allocation5 + $0x130] sm:$0xff]
    %v669 = vld [vmem:[#allocation5 + $0x13c] sm:$0xff]
    %v670 = vld [vmem:[#allocation5 + $0x148] sm:$0xff]
    %v671 = vld [vmem:[#allocation5 + $0x154] sm:$0xff]
    %v672 = vld [vmem:[#allocation5 + $0x160] sm:$0xff]
    %v673 = vld [vmem:[#allocation5 + $0x16c] sm:$0xff]
    %v674 = vld [vmem:[#allocation5 + $0x178] sm:$0xff]
    %v675 = vld [vmem:[#allocation5 + $0x184] sm:$0xff]
    %v676 = vld [vmem:[#allocation5 + $0x190] sm:$0xff]
    %v677 = vld [vmem:[#allocation5 + $0x19c] sm:$0xff]
    %v678 = vld [vmem:[#allocation5 + $0x1a8] sm:$0xff]
    %v679 = vld [vmem:[#allocation5 + $0x1b4] sm:$0xff]
    %v680 = vld [vmem:[#allocation5 + $0x1c0] sm:$0xff]
    %v681 = vld [vmem:[#allocation5 + $0x1cc] sm:$0xff]
    %v682 = vld [vmem:[#allocation5 + $0x1d8] sm:$0xff]
    %v683 = vld [vmem:[#allocation5 + $0x1e4] sm:$0xff]
    %v684 = vld [vmem:[#allocation5 + $0x1f0] sm:$0xff]
    %v685 = vld [vmem:[#allocation5 + $0x1fc] sm:$0xff]
    %v686 = vld [vmem:[#allocation5 + $0x208] sm:$0xff]
    %v687 = vld [vmem:[#allocation5 + $0x214] sm:$0xff]
    %v688 = vld [vmem:[#allocation5 + $0x220] sm:$0xff]
    %v689 = vld [vmem:[#allocation5 + $0x22c] sm:$0xff]
    %v690 = vld [vmem:[#allocation5 + $0x238] sm:$0xff]
    %v691 = vpack.c.bf16 %v640, %v640
    %v692 = vpack.c.bf16 %v641, %v641
    %v693 = vpack.c.bf16 %v642, %v642
    %s694 = scalar_lea.vmem [#allocation8], 3
    %v695 = vld [vmem:[%s694] ss:$8 sm:$0x3]
    %v697 = vperm.slane %v695, 0
    %v698 = vperm.slane %v695, 1
    %v749 = vunpack.c.l.b16 %v643
    %v750 = vunpack.c.h.b16 %v643
    %v751 = vunpack.c.l.b16 %v644
    %v752 = vunpack.c.h.b16 %v644
    %v753 = vunpack.c.l.b16 %v645
    %v754 = vunpack.c.h.b16 %v645
    %v755 = vunpack.c.l.b16 %v646
    %v756 = vunpack.c.h.b16 %v646
    %v757 = vunpack.c.l.b16 %v647
    %v758 = vunpack.c.h.b16 %v647
    %v759 = vunpack.c.l.b16 %v648
    %v760 = vunpack.c.h.b16 %v648
    %v761 = vunpack.c.l.b16 %v649
    %v762 = vunpack.c.h.b16 %v649
    %v763 = vunpack.c.l.b16 %v650
    %v764 = vunpack.c.h.b16 %v650
    %v765 = vunpack.c.l.b16 %v651
    %v766 = vunpack.c.h.b16 %v651
    %v767 = vunpack.c.l.b16 %v652
    %v768 = vunpack.c.h.b16 %v652
    %v769 = vunpack.c.l.b16 %v653
    %v770 = vunpack.c.h.b16 %v653
    %v771 = vunpack.c.l.b16 %v654
    %v772 = vunpack.c.h.b16 %v654
    %v773 = vunpack.c.l.b16 %v655
    %v774 = vunpack.c.h.b16 %v655
    %v775 = vunpack.c.l.b16 %v656
    %v776 = vunpack.c.h.b16 %v656
    %v777 = vunpack.c.l.b16 %v657
    %v778 = vunpack.c.h.b16 %v657
    %v779 = vunpack.c.l.b16 %v658
    %v780 = vunpack.c.h.b16 %v658
    %v781 = vunpack.c.l.b16 %v659
    %v782 = vunpack.c.h.b16 %v659
    %v783 = vunpack.c.l.b16 %v660
    %v784 = vunpack.c.h.b16 %v660
    %v785 = vunpack.c.l.b16 %v661
    %v786 = vunpack.c.h.b16 %v661
    %v787 = vunpack.c.l.b16 %v662
    %v788 = vunpack.c.h.b16 %v662
    %v789 = vunpack.c.l.b16 %v663
    %v790 = vunpack.c.h.b16 %v663
    %v791 = vunpack.c.l.b16 %v664
    %v792 = vunpack.c.h.b16 %v664
    %v793 = vunpack.c.l.b16 %v665
    %v794 = vunpack.c.h.b16 %v665
    %v795 = vunpack.c.l.b16 %v666
    %v796 = vunpack.c.h.b16 %v666
    %v797 = vunpack.c.l.b16 %v667
    %v798 = vunpack.c.h.b16 %v667
    %v799 = vunpack.c.l.b16 %v668
    %v800 = vunpack.c.h.b16 %v668
    %v801 = vunpack.c.l.b16 %v669
    %v802 = vunpack.c.h.b16 %v669
    %v803 = vunpack.c.l.b16 %v670
    %v804 = vunpack.c.h.b16 %v670
    %v805 = vunpack.c.l.b16 %v671
    %v806 = vunpack.c.h.b16 %v671
    %v807 = vunpack.c.l.b16 %v672
    %v808 = vunpack.c.h.b16 %v672
    %v809 = vunpack.c.l.b16 %v673
    %v810 = vunpack.c.h.b16 %v673
    %v811 = vunpack.c.l.b16 %v674
    %v812 = vunpack.c.h.b16 %v674
    %v813 = vunpack.c.l.b16 %v675
    %v814 = vunpack.c.h.b16 %v675
    %v815 = vunpack.c.l.b16 %v676
    %v816 = vunpack.c.h.b16 %v676
    %v817 = vunpack.c.l.b16 %v677
    %v818 = vunpack.c.h.b16 %v677
    %v819 = vunpack.c.l.b16 %v678
    %v820 = vunpack.c.h.b16 %v678
    %v821 = vunpack.c.l.b16 %v679
    %v822 = vunpack.c.h.b16 %v679
    %v823 = vunpack.c.l.b16 %v680
    %v824 = vunpack.c.h.b16 %v680
    %v825 = vunpack.c.l.b16 %v681
    %v826 = vunpack.c.h.b16 %v681
    %v827 = vunpack.c.l.b16 %v682
    %v828 = vunpack.c.h.b16 %v682
    %v829 = vunpack.c.l.b16 %v683
    %v830 = vunpack.c.h.b16 %v683
    %v831 = vunpack.c.l.b16 %v684
    %v832 = vunpack.c.h.b16 %v684
    %v833 = vunpack.c.l.b16 %v685
    %v834 = vunpack.c.h.b16 %v685
    %v835 = vunpack.c.l.b16 %v686
    %v836 = vunpack.c.h.b16 %v686
    %v837 = vunpack.c.l.b16 %v687
    %v838 = vunpack.c.h.b16 %v687
    %v839 = vunpack.c.l.b16 %v688
    %v840 = vunpack.c.h.b16 %v688
    %v841 = vunpack.c.l.b16 %v689
    %v842 = vunpack.c.h.b16 %v689
    %v843 = vunpack.c.l.b16 %v690
    %v844 = vunpack.c.h.b16 %v690
    %v845 = vpack.c.b16 %v751, %v749
    %v846 = vpack.c.b16 %v752, %v750
    %v847 = vpack.c.b16 %v755, %v753
    %v848 = vpack.c.b16 %v756, %v754
    %v849 = vpack.c.b16 %v759, %v757
    %v850 = vpack.c.b16 %v760, %v758
    %v851 = vpack.c.b16 %v763, %v761
    %v852 = vpack.c.b16 %v764, %v762
    %v853 = vpack.c.b16 %v767, %v765
    %v854 = vpack.c.b16 %v768, %v766
    %v855 = vpack.c.b16 %v771, %v769
    %v856 = vpack.c.b16 %v772, %v770
    %v857 = vpack.c.b16 %v775, %v773
    %v858 = vpack.c.b16 %v776, %v774
    %v859 = vpack.c.b16 %v779, %v777
    %v860 = vpack.c.b16 %v780, %v778
    %v861 = vpack.c.b16 %v783, %v781
    %v862 = vpack.c.b16 %v784, %v782
    %v863 = vpack.c.b16 %v787, %v785
    %v864 = vpack.c.b16 %v788, %v786
    %v865 = vpack.c.b16 %v791, %v789
    %v866 = vpack.c.b16 %v792, %v790
    %v867 = vpack.c.b16 %v795, %v793
    %v868 = vpack.c.b16 %v796, %v794
    %v869 = vpack.c.b16 %v799, %v797
    %v870 = vpack.c.b16 %v800, %v798
    %v871 = vpack.c.b16 %v803, %v801
    %v872 = vpack.c.b16 %v804, %v802
    %v873 = vpack.c.b16 %v807, %v805
    %v874 = vpack.c.b16 %v808, %v806
    %v875 = vpack.c.b16 %v811, %v809
    %v876 = vpack.c.b16 %v812, %v810
    %v877 = vpack.c.b16 %v815, %v813
    %v878 = vpack.c.b16 %v816, %v814
    %v879 = vpack.c.b16 %v819, %v817
    %v880 = vpack.c.b16 %v820, %v818
    %v881 = vpack.c.b16 %v823, %v821
    %v882 = vpack.c.b16 %v824, %v822
    %v883 = vpack.c.b16 %v827, %v825
    %v884 = vpack.c.b16 %v828, %v826
    %v885 = vpack.c.b16 %v831, %v829
    %v886 = vpack.c.b16 %v832, %v830
    %v887 = vpack.c.b16 %v835, %v833
    %v888 = vpack.c.b16 %v836, %v834
    %v889 = vpack.c.b16 %v839, %v837
    %v890 = vpack.c.b16 %v840, %v838
    %v891 = vpack.c.b16 %v843, %v841
    %v892 = vpack.c.b16 %v844, %v842
    %941 = vmatpush.bf16.msra.mxu0 %v859
    %942 = vmatpush.bf16.msra.mxu0 %v857
    %943 = vmatpush.bf16.msra.mxu0 %v855
    %944 = vmatpush.bf16.msra.mxu0 %v853
    %945 = vmatpush.bf16.msra.mxu0 %v851
    %946 = vmatpush.bf16.msra.mxu0 %v849
    %947 = vmatpush.bf16.msra.mxu0 %v847
    %948 = vmatpush.bf16.msra.mxu0 %v845
    %949 = vmatmul.bf16.gmra.mxu0 %v691
    %v950 = vpop.f32.mrf.mxu0
    %v951 = vadd.f32 %v697, %v950
    %v952 = vpop.f32.mrf.mxu0
    %953 = vdwg.mxu0
    %954 = vmatpush.bf16.msra.mxu0 %v875
    %955 = vmatpush.bf16.msra.mxu0 %v873
    %956 = vmatpush.bf16.msra.mxu0 %v871
    %957 = vmatpush.bf16.msra.mxu0 %v869
    %958 = vmatpush.bf16.msra.mxu0 %v867
    %959 = vmatpush.bf16.msra.mxu0 %v865
    %960 = vmatpush.bf16.msra.mxu0 %v863
    %961 = vmatpush.bf16.msra.mxu0 %v861
    %962 = vmatmul.bf16.gmra.mxu0 %v692
    %v963 = vpop.f32.mrf.mxu0
    %v964 = vadd.f32 %v951, %v963
    %v965 = vpop.f32.mrf.mxu0
    %966 = vdwg.mxu0
    %967 = vmatpush.bf16.msra.mxu0 %v891
    %968 = vmatpush.bf16.msra.mxu0 %v889
    %969 = vmatpush.bf16.msra.mxu0 %v887
    %970 = vmatpush.bf16.msra.mxu0 %v885
    %971 = vmatpush.bf16.msra.mxu0 %v883
    %972 = vmatpush.bf16.msra.mxu0 %v881
    %973 = vmatpush.bf16.msra.mxu0 %v879
    %974 = vmatpush.bf16.msra.mxu0 %v877
    %975 = vmatmul.bf16.gmra.mxu0 %v693
    %v976 = vpop.f32.mrf.mxu0
    %v977 = vadd.f32 %v964, %v976
    %v978 = vpop.f32.mrf.mxu0
    %979 = vdwg.mxu0
    %980 = vmatpush.bf16.msra.mxu0 %v860
    %981 = vmatpush.bf16.msra.mxu0 %v858
    %982 = vmatpush.bf16.msra.mxu0 %v856
    %983 = vmatpush.bf16.msra.mxu0 %v854
    %984 = vmatpush.bf16.msra.mxu0 %v852
    %985 = vmatpush.bf16.msra.mxu0 %v850
    %986 = vmatpush.bf16.msra.mxu0 %v848
    %987 = vmatpush.bf16.msra.mxu0 %v846
    %988 = vmatmul.bf16.gmra.mxu0 %v691
    %v989 = vpop.f32.mrf.mxu0
    %v990 = vadd.f32 %v698, %v989
    %v991 = vpop.f32.mrf.mxu0
    %992 = vdwg.mxu0
    %993 = vmatpush.bf16.msra.mxu0 %v876
    %994 = vmatpush.bf16.msra.mxu0 %v874
    %995 = vmatpush.bf16.msra.mxu0 %v872
    %996 = vmatpush.bf16.msra.mxu0 %v870
    %997 = vmatpush.bf16.msra.mxu0 %v868
    %998 = vmatpush.bf16.msra.mxu0 %v866
    %999 = vmatpush.bf16.msra.mxu0 %v864
    %1000 = vmatpush.bf16.msra.mxu0 %v862
    %1001 = vmatmul.bf16.gmra.mxu0 %v692
    %v1002 = vpop.f32.mrf.mxu0
    %v1003 = vadd.f32 %v990, %v1002
    %v1004 = vpop.f32.mrf.mxu0
    %1005 = vdwg.mxu0
    %1006 = vmatpush.bf16.msra.mxu0 %v892
    %1007 = vmatpush.bf16.msra.mxu0 %v890
    %1008 = vmatpush.bf16.msra.mxu0 %v888
    %1009 = vmatpush.bf16.msra.mxu0 %v886
    %1010 = vmatpush.bf16.msra.mxu0 %v884
    %1011 = vmatpush.bf16.msra.mxu0 %v882
    %1012 = vmatpush.bf16.msra.mxu0 %v880
    %1013 = vmatpush.bf16.msra.mxu0 %v878
    %1014 = vmatmul.bf16.gmra.mxu0 %v693
    %v1015 = vpop.f32.mrf.mxu0
    %v1016 = vadd.f32 %v1003, %v1015
    %v1017 = vpop.f32.mrf.mxu0
    %1018 = vdwg.mxu0
    %v1019 = vmax.f32 %v977, 0.0
    %v1020 = vmax.f32 %v1016, 0.0
    %v1021 = vld [vmem:[#allocation7 + $0x10] sm:$0xf]
    %v1022 = vld [vmem:[#allocation7 + $0x2c] sm:$0xf]
    %v1023 = vld [vmem:[#allocation7 + $0x48] sm:$0xf]
    %v1024 = vld [vmem:[#allocation7 + $0x64] sm:$0xf]
    %v1025 = vld [vmem:[#allocation7 + $0x80] sm:$0xf]
    %v1026 = vld [vmem:[#allocation7 + $0x9c] sm:$0xf]
    %v1027 = vld [vmem:[#allocation7 + $0xb8] sm:$0xf]
    %v1028 = vld [vmem:[#allocation7 + $0xd4] sm:$0xf]
    %v1029 = vld [vmem:[#allocation7 + $0xf0] sm:$0xf]
    %v1030 = vld [vmem:[#allocation7 + $0x10c] sm:$0xf]
    %v1031 = vld [vmem:[#allocation7 + $0x128] sm:$0xf]
    %v1032 = vld [vmem:[#allocation7 + $0x144] sm:$0xf]
    %v1033 = vld [vmem:[#allocation7 + $0x160] sm:$0xf]
    %v1034 = vld [vmem:[#allocation7 + $0x17c] sm:$0xf]
    %v1035 = vld [vmem:[#allocation7 + $0x198] sm:$0xf]
    %v1036 = vld [vmem:[#allocation7 + $0x1b4] sm:$0xf]
    %v1037 = vpack.c.bf16 %v1019, %v1019
    %v1038 = vld [vmem:[#allocation8 + $0x4] ss:$0 sm:$0xff]
    %v1055 = vunpack.c.l.b16 %v1021
    %v1056 = vunpack.c.l.b16 %v1022
    %v1057 = vunpack.c.l.b16 %v1023
    %v1058 = vunpack.c.l.b16 %v1024
    %v1059 = vunpack.c.l.b16 %v1025
    %v1060 = vunpack.c.l.b16 %v1026
    %v1061 = vunpack.c.l.b16 %v1027
    %v1062 = vunpack.c.l.b16 %v1028
    %v1063 = vunpack.c.l.b16 %v1029
    %v1064 = vunpack.c.l.b16 %v1030
    %v1065 = vunpack.c.l.b16 %v1031
    %v1066 = vunpack.c.l.b16 %v1032
    %v1067 = vunpack.c.l.b16 %v1033
    %v1068 = vunpack.c.l.b16 %v1034
    %v1069 = vunpack.c.l.b16 %v1035
    %v1070 = vunpack.c.l.b16 %v1036
    %v1071 = vpack.c.b16 %v1056, %v1055
    %v1072 = vpack.c.b16 %v1058, %v1057
    %v1073 = vpack.c.b16 %v1060, %v1059
    %v1074 = vpack.c.b16 %v1062, %v1061
    %v1075 = vpack.c.b16 %v1064, %v1063
    %v1076 = vpack.c.b16 %v1066, %v1065
    %v1077 = vpack.c.b16 %v1068, %v1067
    %v1078 = vpack.c.b16 %v1070, %v1069
    %1087 = vmatpush.bf16.msra.mxu0 %v1078
    %1088 = vmatpush.bf16.msra.mxu0 %v1077
    %1089 = vmatpush.bf16.msra.mxu0 %v1076
    %1090 = vmatpush.bf16.msra.mxu0 %v1075
    %1091 = vmatpush.bf16.msra.mxu0 %v1074
    %1092 = vmatpush.bf16.msra.mxu0 %v1073
    %1093 = vmatpush.bf16.msra.mxu0 %v1072
    %1094 = vmatpush.bf16.msra.mxu0 %v1071
    %1095 = vmatmul.bf16.gmra.mxu0 %v1037
    %v1096 = vpop.f32.mrf.mxu0
    %v1097 = vadd.f32 %v1038, %v1096
    %v1098 = vpop.f32.mrf.mxu0
    %1099 = vdwg.mxu0
    %v1100 = vmax.f32 %v1097, 0.0
    %v1101 = vld [vmem:[#allocation7 + $0x14] sm:$0xf]
    %v1102 = vld [vmem:[#allocation7 + $0x30] sm:$0xf]
    %v1103 = vld [vmem:[#allocation7 + $0x4c] sm:$0xf]
    %v1104 = vld [vmem:[#allocation7 + $0x68] sm:$0xf]
    %v1105 = vld [vmem:[#allocation7 + $0x84] sm:$0xf]
    %v1106 = vld [vmem:[#allocation7 + $0xa0] sm:$0xf]
    %v1107 = vld [vmem:[#allocation7 + $0xbc] sm:$0xf]
    %v1108 = vld [vmem:[#allocation7 + $0xd8] sm:$0xf]
    %v1109 = vld [vmem:[#allocation7 + $0xf4] sm:$0xf]
    %v1110 = vld [vmem:[#allocation7 + $0x110] sm:$0xf]
    %v1111 = vld [vmem:[#allocation7 + $0x12c] sm:$0xf]
    %v1112 = vld [vmem:[#allocation7 + $0x148] sm:$0xf]
    %v1113 = vld [vmem:[#allocation7 + $0x164] sm:$0xf]
    %v1114 = vld [vmem:[#allocation7 + $0x180] sm:$0xf]
    %v1115 = vld [vmem:[#allocation7 + $0x19c] sm:$0xf]
    %v1116 = vld [vmem:[#allocation7 + $0x1b8] sm:$0xf]
    %v1117 = vpack.c.bf16 %v1100, %v1100
    %v1118 = vld [vmem:[#allocation8 + $0x5] ss:$0 sm:$0xff]
    %v1135 = vunpack.c.l.b16 %v1101
    %v1136 = vunpack.c.l.b16 %v1102
    %v1137 = vunpack.c.l.b16 %v1103
    %v1138 = vunpack.c.l.b16 %v1104
    %v1139 = vunpack.c.l.b16 %v1105
    %v1140 = vunpack.c.l.b16 %v1106
    %v1141 = vunpack.c.l.b16 %v1107
    %v1142 = vunpack.c.l.b16 %v1108
    %v1143 = vunpack.c.l.b16 %v1109
    %v1144 = vunpack.c.l.b16 %v1110
    %v1145 = vunpack.c.l.b16 %v1111
    %v1146 = vunpack.c.l.b16 %v1112
    %v1147 = vunpack.c.l.b16 %v1113
    %v1148 = vunpack.c.l.b16 %v1114
    %v1149 = vunpack.c.l.b16 %v1115
    %v1150 = vunpack.c.l.b16 %v1116
    %v1151 = vpack.c.b16 %v1136, %v1135
    %v1152 = vpack.c.b16 %v1138, %v1137
    %v1153 = vpack.c.b16 %v1140, %v1139
    %v1154 = vpack.c.b16 %v1142, %v1141
    %v1155 = vpack.c.b16 %v1144, %v1143
    %v1156 = vpack.c.b16 %v1146, %v1145
    %v1157 = vpack.c.b16 %v1148, %v1147
    %v1158 = vpack.c.b16 %v1150, %v1149
    %1167 = vmatpush.bf16.msra.mxu0 %v1158
    %1168 = vmatpush.bf16.msra.mxu0 %v1157
    %1169 = vmatpush.bf16.msra.mxu0 %v1156
    %1170 = vmatpush.bf16.msra.mxu0 %v1155
    %1171 = vmatpush.bf16.msra.mxu0 %v1154
    %1172 = vmatpush.bf16.msra.mxu0 %v1153
    %1173 = vmatpush.bf16.msra.mxu0 %v1152
    %1174 = vmatpush.bf16.msra.mxu0 %v1151
    %1175 = vmatmul.bf16.gmra.mxu0 %v1117
    %v1176 = vpop.f32.mrf.mxu0
    %v1177 = vadd.f32 %v1118, %v1176
    %v1178 = vpop.f32.mrf.mxu0
    %1179 = vdwg.mxu0
    %vm1180 = vcmp.lt.s32.totalorder %v609, 3
    %v1181 = vsel %vm1180, %v1177, -inf
    %1182 = vmax.xlane.f32.xlu0 %v1181
    %v1183 = vpop.xlane.xlu0 %1182
    %v1184 = vsub.f32 %v1181, %v1183
    %v1185 = vmul.f32 %v1184, 1.442695
    %v1186 = vpow.pop %v1185
    %1187 = vadd.xlane.f32.xlu0 %v1186
    %v1188 = vpop.xlane.xlu0 %1187
    %v1189 = vlog2.pop %v1188
    %v1190 = vmul.f32 %v1189, 0.6931472
    %v1191 = vsub.f32 %v1184, %v1190
    %1192 = vst [vmem:[#allocation10] sm:$0xff] %v1191
    %v1193 = vld [vmem:[#allocation7 + $0x18] sm:$0xf]
    %v1194 = vld [vmem:[#allocation7 + $0x34] sm:$0xf]
    %v1195 = vld [vmem:[#allocation7 + $0x50] sm:$0xf]
    %v1196 = vld [vmem:[#allocation7 + $0x6c] sm:$0xf]
    %v1197 = vld [vmem:[#allocation7 + $0x88] sm:$0xf]
    %v1198 = vld [vmem:[#allocation7 + $0xa4] sm:$0xf]
    %v1199 = vld [vmem:[#allocation7 + $0xc0] sm:$0xf]
    %v1200 = vld [vmem:[#allocation7 + $0xdc] sm:$0xf]
    %v1201 = vld [vmem:[#allocation7 + $0xf8] sm:$0xf]
    %v1202 = vld [vmem:[#allocation7 + $0x114] sm:$0xf]
    %v1203 = vld [vmem:[#allocation7 + $0x130] sm:$0xf]
    %v1204 = vld [vmem:[#allocation7 + $0x14c] sm:$0xf]
    %v1205 = vld [vmem:[#allocation7 + $0x168] sm:$0xf]
    %v1206 = vld [vmem:[#allocation7 + $0x184] sm:$0xf]
    %v1207 = vld [vmem:[#allocation7 + $0x1a0] sm:$0xf]
    %v1208 = vld [vmem:[#allocation7 + $0x1bc] sm:$0xf]
    %v1209 = vpack.c.bf16 %v1020, %v1020
    %v1210 = vld [vmem:[#allocation8 + $0x6] ss:$0 sm:$0xff]
    %v1227 = vunpack.c.l.b16 %v1193
    %v1228 = vunpack.c.l.b16 %v1194
    %v1229 = vunpack.c.l.b16 %v1195
    %v1230 = vunpack.c.l.b16 %v1196
    %v1231 = vunpack.c.l.b16 %v1197
    %v1232 = vunpack.c.l.b16 %v1198
    %v1233 = vunpack.c.l.b16 %v1199
    %v1234 = vunpack.c.l.b16 %v1200
    %v1235 = vunpack.c.l.b16 %v1201
    %v1236 = vunpack.c.l.b16 %v1202
    %v1237 = vunpack.c.l.b16 %v1203
    %v1238 = vunpack.c.l.b16 %v1204
    %v1239 = vunpack.c.l.b16 %v1205
    %v1240 = vunpack.c.l.b16 %v1206
    %v1241 = vunpack.c.l.b16 %v1207
    %v1242 = vunpack.c.l.b16 %v1208
    %v1243 = vpack.c.b16 %v1228, %v1227
    %v1244 = vpack.c.b16 %v1230, %v1229
    %v1245 = vpack.c.b16 %v1232, %v1231
    %v1246 = vpack.c.b16 %v1234, %v1233
    %v1247 = vpack.c.b16 %v1236, %v1235
    %v1248 = vpack.c.b16 %v1238, %v1237
    %v1249 = vpack.c.b16 %v1240, %v1239
    %v1250 = vpack.c.b16 %v1242, %v1241
    %1259 = vmatpush.bf16.msra.mxu0 %v1250
    %1260 = vmatpush.bf16.msra.mxu0 %v1249
    %1261 = vmatpush.bf16.msra.mxu0 %v1248
    %1262 = vmatpush.bf16.msra.mxu0 %v1247
    %1263 = vmatpush.bf16.msra.mxu0 %v1246
    %1264 = vmatpush.bf16.msra.mxu0 %v1245
    %1265 = vmatpush.bf16.msra.mxu0 %v1244
    %1266 = vmatpush.bf16.msra.mxu0 %v1243
    %1267 = vmatmul.bf16.gmra.mxu0 %v1209
    %v1268 = vpop.f32.mrf.mxu0
    %v1269 = vadd.f32 %v1210, %v1268
    %v1270 = vpop.f32.mrf.mxu0
    %1271 = vdwg.mxu0
    %vm1272 = vcmp.lt.s32.totalorder %v609, 5
    %v1273 = vsel %vm1272, %v1269, -inf
    %1274 = vmax.xlane.f32.xlu0 %v1273
    %v1275 = vpop.xlane.xlu0 %1274
    %v1276 = vsub.f32 %v1273, %v1275
    %v1277 = vmul.f32 %v1276, 1.442695
    %v1278 = vpow.pop %v1277
    %1279 = vadd.xlane.f32.xlu0 %v1278
    %v1280 = vpop.xlane.xlu0 %1279
    %v1281 = vlog2.pop %v1280
    %v1282 = vmul.f32 %v1281, 0.6931472
    %v1283 = vsub.f32 %v1276, %v1282
    %1284 = vst [vmem:[#allocation11] sm:$0xff] %v1283
    // Predicated region
    $region34: #{tpu_custom_call.1} parent=1 // pred_check
      _
    $region35: #{tpu_custom_call.1} parent=1 // pred_check_branch
      %1286 = sbr.rel (0) target = $region37
    $region36: #{tpu_custom_call.1} parent=1 // pred_region
      %1288 = vsyncadd [#allocation4], 0
      %s1290 = sshll.u32 [#allocation10], 4
      %s1291 = int_to_ptr.vmem [resolvable:$true] %s1290
      %s1292 = sshll.u32 %s4, 4
      %s1293 = int_to_ptr.hbm [resolvable:$true] %s1292
      %1295 = dma.vmem_to_hbm [thread:$0]  %s1291, 128, %s1293, [#allocation4]
    $region37: #{tpu_custom_call.1} parent=1 // pred_fallthru
      _
    // Predicated region
    $region38: #{tpu_custom_call.1} parent=1 // pred_check
      _
    $region39: #{tpu_custom_call.1} parent=1 // pred_check_branch
      %1297 = sbr.rel (0) target = $region41
    $region40: #{tpu_custom_call.1} parent=1 // pred_region
      %1299 = vsyncadd [#allocation12], 0
      %s1301 = sshll.u32 [#allocation11], 4
      %s1302 = int_to_ptr.vmem [resolvable:$true] %s1301
      %s1303 = sshll.u32 %s5, 4
      %s1304 = int_to_ptr.hbm [resolvable:$true] %s1303
      %1306 = dma.vmem_to_hbm [thread:$0]  %s1302, 128, %s1304, [#allocation12]
    $region41: #{tpu_custom_call.1} parent=1 // pred_fallthru
      _
    // Predicated region
    $region42: #{tpu_custom_call.1} parent=1 // pred_check
      _
    $region43: #{tpu_custom_call.1} parent=1 // pred_check_branch
      %1308 = sbr.rel (0) target = $region45
    $region44: #{tpu_custom_call.1} parent=1 // pred_region
      %1310 = dma.done [#allocation4], 128
    $region45: #{tpu_custom_call.1} parent=1 // pred_fallthru
      _
    // Predicated region
    $region46: #{tpu_custom_call.1} parent=1 // pred_check
      _
    $region47: #{tpu_custom_call.1} parent=1 // pred_check_branch
      %1312 = sbr.rel (0) target = $region49
    $region48: #{tpu_custom_call.1} parent=1 // pred_region
      %1314 = dma.done [#allocation12], 128
    $region49: #{tpu_custom_call.1} parent=1 // pred_fallthru
      _
    %1315 = vsyncpa [#allocation3], 1
    %1316 = vsyncpa [#allocation6], 1
    %1317 = vsyncpa [#allocation9], 1
    %1318 = vsyncpa [#allocation4], 1
    %1319 = vsyncpa [#allocation12], 1

</llo_original>
